<compile_context>
chip_gen: v7x
topology: tpu7x:2x2x1
jax: 0.10.0
libtpu: 0.0.40
codegen_flags: <defaults>
</compile_context>

<pallas_src>
import jax
import jax.numpy as jnp
from jax.experimental import pallas as pl
from jax.experimental.pallas import tpu as pltpu

KH, KW = 3, 3          # fixed 3x3 kernel, matches torch.randn(3, 3) parameter
_LANES = 128           # vreg lane width
_SUBLANES = 8          # f32 sublane tile
_MAX_CHUNKS = 128      # cap on statically-unrolled in-kernel chunks


def _cdiv(a, b):
    return -(-a // b)


def _round_up(a, b):
    return _cdiv(a, b) * b


def _vmem_capacity_bytes():
    try:
        return int(pltpu.get_tpu_info().vmem_capacity_bytes)
    except Exception:
        return 64 << 20   # conservative (v7x per-TC VMEM)


def _row_chunks(oh):
    """Static (row_start, row_len) chunks of the output-row axis."""
    ch = _SUBLANES * max(1, _cdiv(_cdiv(oh, _SUBLANES), _MAX_CHUNKS))
    return [(r0, min(ch, oh - r0)) for r0 in range(0, oh, ch)]


# ----------------------------------------------------------------------------
# Natural (N, H, W) layout: planes on the leading axis, W on lanes.
# ----------------------------------------------------------------------------
def _make_nhw_kernel(chunks):
    """chunks: static list of (n0, nl, r0, rl) tiles of the (tn, OH) space."""

    def kernel(k_ref, x_ref, o_ref):
        # k_ref: SMEM (3, 3) f32 (scalar-prefetched weights)
        # x_ref: VMEM (tn, H, W) f32;  o_ref: VMEM (tn, OH, OW) f32
        W = x_ref.shape[2]
        OW = o_ref.shape[2]
        # Hoist the 9 SMEM weight reads (and their broadcasts) out of the loop.
        k = [[k_ref[i, j] for j in range(KW)] for i in range(KH)]
        for (n0, nl, r0, rl) in chunks:
            # rl output rows need rl+2 input rows (2-row halo).
            xr = x_ref[n0:n0 + nl, r0:r0 + rl + 2, :]         # (nl, rl+2, W)
            # One lane roll per column tap (XLU), reused by all 3 row taps.
            x1 = pltpu.roll(xr, shift=W - 1, axis=2)          # col + 1
            x2 = pltpu.roll(xr, shift=W - 2, axis=2)          # col + 2
            # 9-tap sum as a single expression -> stays in vregs, one store.
            acc = xr[:, 0:rl, :] * k[0][0]
            acc = acc + x1[:, 0:rl, :] * k[0][1]
            acc = acc + x2[:, 0:rl, :] * k[0][2]
            acc = acc + xr[:, 1:rl + 1, :] * k[1][0]
            acc = acc + x1[:, 1:rl + 1, :] * k[1][1]
            acc = acc + x2[:, 1:rl + 1, :] * k[1][2]
            acc = acc + xr[:, 2:rl + 2, :] * k[2][0]
            acc = acc + x1[:, 2:rl + 2, :] * k[2][1]
            acc = acc + x2[:, 2:rl + 2, :] * k[2][2]
            # Drop the 2 wrapped (garbage) columns before the store; the output
            # block is already OW wide, so no wrapper-side relayout pass.
            o_ref[n0:n0 + nl, r0:r0 + rl, :] = acc[:, :, :OW]

    return kernel


def _select_tn(N, H, W, OH, OW, block_budget):
    """Planes per grid block + block count, with (8,128)-padded VMEM math."""
    vw = _cdiv(W, _LANES)                    # lane-tiles per row
    cn = max(1, 4 // vw)                     # planes per in-kernel chunk
    rchunks = _row_chunks(OH)
    # Real (padded) VMEM footprint of one input + one output plane, f32.
    per_plane = (_round_up(H, _SUBLANES) * _round_up(W, _LANES)
                 + _round_up(OH, _SUBLANES) * _round_up(OW, _LANES)) * 4
    tn = max(1, block_budget // per_plane)                   # VMEM budget
    tn = min(tn, cn * max(1, _MAX_CHUNKS // len(rchunks)))   # unroll budget
    tn = min(tn, N)
    # >= 2 blocks (and an even count) so the "parallel" axis can balance
    # across the two TensorCores on v7x; negligible cost elsewhere.
    n_blocks = _cdiv(N, tn)
    if n_blocks == 1 and N >= 2:
        n_blocks = 2
    elif n_blocks > 1 and n_blocks % 2 == 1:
        n_blocks += 1
    n_blocks = min(n_blocks, N)
    tn = _cdiv(N, n_blocks)
    n_blocks = _cdiv(N, tn)
    return tn, n_blocks, cn


def _conv4d_nhw(x_flat, kernel, OH, OW, block_budget, vmem_limit):
    N, H, W = x_flat.shape
    tn, n_blocks, cn = _select_tn(N, H, W, OH, OW, block_budget)
    chunks = []
    for n0 in range(0, tn, cn):
        nl = min(cn, tn - n0)
        for (r0, rl) in _row_chunks(OH):
            chunks.append((n0, nl, r0, rl))
    kern = _make_nhw_kernel(tuple(chunks))

    grid_spec = pltpu.PrefetchScalarGridSpec(
        num_scalar_prefetch=1,                 # 3x3 weights land in SMEM
        grid=(n_blocks,),
        in_specs=[pl.BlockSpec((tn, H, W), lambda n, k: (n, 0, 0))],
        out_specs=pl.BlockSpec((tn, OH, OW), lambda n, k: (n, 0, 0)),
    )
    # Trailing partial plane-block (N % tn != 0) relies on Pallas clipping:
    # garbage only lands in dropped output planes (plane axis is independent).
    return pl.pallas_call(
        kern,
        out_shape=jax.ShapeDtypeStruct((N, OH, OW), jnp.float32),
        grid_spec=grid_spec,
        compiler_params=pltpu.CompilerParams(
            dimension_semantics=("parallel",),
            vmem_limit_bytes=vmem_limit),
    )(kernel, x_flat)


# ----------------------------------------------------------------------------
# Lane-dense (H, W, N) layout: planes on the lane axis (small W, large B*C).
# ----------------------------------------------------------------------------
def _make_hwn_kernel(row_chunks):

    def kernel(k_ref, x_ref, o_ref):
        # x_ref: VMEM (H, W, TNL) f32;  o_ref: VMEM (OH, OW, TNL) f32
        OW = o_ref.shape[1]
        k = [[k_ref[i, j] for j in range(KW)] for i in range(KH)]
        for (r0, rl) in row_chunks:
            acc = x_ref[r0:r0 + rl, 0:OW, :] * k[0][0]
            for i in range(KH):
                for j in range(KW):
                    if i == 0 and j == 0:
                        continue
                    acc = acc + x_ref[r0 + i:r0 + i + rl, j:j + OW, :] * k[i][j]
            o_ref[r0:r0 + rl, :, :] = acc        # unmasked lane-dense store

    return kernel


def _conv4d_hwn(x_flat, kernel, OH, OW, vmem_limit):
    N, H, W = x_flat.shape
    x_l = jnp.transpose(x_flat, (1, 2, 0))       # (H, W, N) -- one-time XLA op
    n_blocks = _cdiv(N, _LANES)
    kern = _make_hwn_kernel(tuple(_row_chunks(OH)))

    grid_spec = pltpu.PrefetchScalarGridSpec(
        num_scalar_prefetch=1,
        grid=(n_blocks,),
        in_specs=[pl.BlockSpec((H, W, _LANES), lambda n, k: (0, 0, n))],
        out_specs=pl.BlockSpec((OH, OW, _LANES), lambda n, k: (0, 0, n)),
    )
    out_l = pl.pallas_call(
        kern,
        out_shape=jax.ShapeDtypeStruct((OH, OW, N), jnp.float32),
        grid_spec=grid_spec,
        compiler_params=pltpu.CompilerParams(
            dimension_semantics=("parallel",),
            vmem_limit_bytes=vmem_limit),
    )(kernel, x_l)
    return jnp.transpose(out_l, (2, 0, 1))       # (N, OH, OW)


# ----------------------------------------------------------------------------
# Public wrapper
# ----------------------------------------------------------------------------
def conv4d(x: jax.Array, kernel: jax.Array) -> jax.Array:
    """x: (B, C, H, W) float32, kernel: (3, 3) float32 -> (B, C, H-2, W-2)."""
    B, C, H, W = x.shape
    assert kernel.shape == (KH, KW)
    assert H >= KH and W >= KW
    OH, OW = H - (KH - 1), W - (KW - 1)
    N = B * C
    x_flat = x.astype(jnp.float32).reshape(N, H, W)
    kernel = kernel.astype(jnp.float32)

    vmem_cap = _vmem_capacity_bytes()
    block_budget = max(1 << 20, vmem_cap // 16)   # ~8 MiB v5e/v6e, ~4 MiB v7x
    vmem_limit = int(min(vmem_cap // 2, 64 << 20))

    # Lane-dense path pays off when W wastes lanes and there are enough planes
    # to fill the lane axis; otherwise keep the natural layout (no transposes).
    use_lane_major = (
        W < 64 and N >= _LANES
        and _round_up(W, _SUBLANES) * _LANES * (H + OH) * 4 <= block_budget)

    if use_lane_major:
        out_flat = _conv4d_hwn(x_flat, kernel, OH, OW, vmem_limit)
    else:
        out_flat = _conv4d_nhw(x_flat, kernel, OH, OW, block_budget, vmem_limit)
    return out_flat.reshape(B, C, OH, OW)


def _reference(x, kernel):
    """Pure-JAX reference: depthwise valid cross-correlation, shared 3x3."""
    OH, OW = x.shape[2] - (KH - 1), x.shape[3] - (KW - 1)
    out = jnp.zeros(x.shape[:2] + (OH, OW), jnp.float32)
    for i in range(KH):
        for j in range(KW):
            out = out + x[:, :, i:i + OH, j:j + OW].astype(jnp.float32) * kernel[i, j]
    return out


if __name__ == "__main__":
    key = jax.random.PRNGKey(0)
    kx, kk = jax.random.split(key)
    # deterministic stand-in for torch.randn(3, 3) parameter init
    kernel = jax.random.normal(kk, (KH, KW), dtype=jnp.float32)

    # 1) Main shape implied by the module (NCHW input, shared 3x3 kernel).
    x = jax.random.normal(kx, (2, 4, 16, 16), dtype=jnp.float32)
    out = jax.block_until_ready(conv4d(x, kernel))
    assert out.shape == (2, 4, 14, 14), out.shape
    assert jnp.allclose(out, _reference(x, kernel), atol=1e-5, rtol=1e-5)

    # 2) Exercise the lane-dense planes-on-lanes path (small W, B*C >= 128).
    x2 = jax.random.normal(jax.random.PRNGKey(1), (2, 64, 12, 16), jnp.float32)
    out2 = jax.block_until_ready(conv4d(x2, kernel))
    assert jnp.allclose(out2, _reference(x2, kernel), atol=1e-5, rtol=1e-5)

    # 3) Exercise partial trailing plane-blocks (N not divisible by tn).
    x3 = jax.random.normal(jax.random.PRNGKey(2), (1, 3, 10, 20), jnp.float32)
    out3 = jax.block_until_ready(conv4d(x3, kernel))
    assert jnp.allclose(out3, _reference(x3, kernel), atol=1e-5, rtol=1e-5)

    print("KERNEL_OK")
</pallas_src>

<mosaic_0001>
module attributes {stable_mosaic.version = 11 : i64} {
  func.func @kernel(%arg0: i32, %arg1: memref<3x3xf32, #tpu.memory_space<smem>>, %arg2: memref<4x16x16xf32, #tpu.memory_space<vmem>>, %arg3: memref<4x14x14xf32, #tpu.memory_space<vmem>>) attributes {dimension_semantics = [#tpu.dimension_semantics<parallel>], iteration_bounds = array<i64: 2>, scalar_prefetch = 1 : i64, scratch_operands = 0 : i64, tpu.core_type = #tpu.core_type<tc>, window_params = [{transform_indices = @transform_0, window_bounds = array<i64: 4, 16, 16>}, {transform_indices = @transform_1, window_bounds = array<i64: 4, 14, 14>}]} {
    %c0 = arith.constant 0 : index
    %c0_0 = arith.constant 0 : index
    %0 = memref.load %arg1[%c0, %c0_0] : memref<3x3xf32, #tpu.memory_space<smem>>
    %c0_1 = arith.constant 0 : index
    %c1 = arith.constant 1 : index
    %1 = memref.load %arg1[%c0_1, %c1] : memref<3x3xf32, #tpu.memory_space<smem>>
    %c0_2 = arith.constant 0 : index
    %c2 = arith.constant 2 : index
    %2 = memref.load %arg1[%c0_2, %c2] : memref<3x3xf32, #tpu.memory_space<smem>>
    %c1_3 = arith.constant 1 : index
    %c0_4 = arith.constant 0 : index
    %3 = memref.load %arg1[%c1_3, %c0_4] : memref<3x3xf32, #tpu.memory_space<smem>>
    %c1_5 = arith.constant 1 : index
    %c1_6 = arith.constant 1 : index
    %4 = memref.load %arg1[%c1_5, %c1_6] : memref<3x3xf32, #tpu.memory_space<smem>>
    %c1_7 = arith.constant 1 : index
    %c2_8 = arith.constant 2 : index
    %5 = memref.load %arg1[%c1_7, %c2_8] : memref<3x3xf32, #tpu.memory_space<smem>>
    %c2_9 = arith.constant 2 : index
    %c0_10 = arith.constant 0 : index
    %6 = memref.load %arg1[%c2_9, %c0_10] : memref<3x3xf32, #tpu.memory_space<smem>>
    %c2_11 = arith.constant 2 : index
    %c1_12 = arith.constant 1 : index
    %7 = memref.load %arg1[%c2_11, %c1_12] : memref<3x3xf32, #tpu.memory_space<smem>>
    %c2_13 = arith.constant 2 : index
    %c2_14 = arith.constant 2 : index
    %8 = memref.load %arg1[%c2_13, %c2_14] : memref<3x3xf32, #tpu.memory_space<smem>>
    %c0_15 = arith.constant 0 : index
    %c0_16 = arith.constant 0 : index
    %c0_17 = arith.constant 0 : index
    %9 = vector.load %arg2[%c0_15, %c0_16, %c0_17] : memref<4x16x16xf32, #tpu.memory_space<vmem>>, vector<4x10x16xf32>
    %c15_i32 = arith.constant 15 : i32
    %10 = tpu.dynamic_rotate %9 by %c15_i32 dim 2 : vector<4x10x16xf32>, i32 -> vector<4x10x16xf32>
    %c14_i32 = arith.constant 14 : i32
    %11 = tpu.dynamic_rotate %9 by %c14_i32 dim 2 : vector<4x10x16xf32>, i32 -> vector<4x10x16xf32>
    %12 = vector.extract_strided_slice %9 {offsets = [0, 0, 0], sizes = [4, 8, 16], strides = [1, 1, 1]} : vector<4x10x16xf32> to vector<4x8x16xf32>
    %13 = vector.broadcast %0 : f32 to vector<4x8x16xf32>
    %14 = arith.mulf %12, %13 : vector<4x8x16xf32>
    %15 = vector.extract_strided_slice %10 {offsets = [0, 0, 0], sizes = [4, 8, 16], strides = [1, 1, 1]} : vector<4x10x16xf32> to vector<4x8x16xf32>
    %16 = vector.broadcast %1 : f32 to vector<4x8x16xf32>
    %17 = arith.mulf %15, %16 : vector<4x8x16xf32>
    %18 = arith.addf %14, %17 : vector<4x8x16xf32>
    %19 = vector.extract_strided_slice %11 {offsets = [0, 0, 0], sizes = [4, 8, 16], strides = [1, 1, 1]} : vector<4x10x16xf32> to vector<4x8x16xf32>
    %20 = vector.broadcast %2 : f32 to vector<4x8x16xf32>
    %21 = arith.mulf %19, %20 : vector<4x8x16xf32>
    %22 = arith.addf %18, %21 : vector<4x8x16xf32>
    %23 = vector.extract_strided_slice %9 {offsets = [0, 1, 0], sizes = [4, 8, 16], strides = [1, 1, 1]} : vector<4x10x16xf32> to vector<4x8x16xf32>
    %24 = vector.broadcast %3 : f32 to vector<4x8x16xf32>
    %25 = arith.mulf %23, %24 : vector<4x8x16xf32>
    %26 = arith.addf %22, %25 : vector<4x8x16xf32>
    %27 = vector.extract_strided_slice %10 {offsets = [0, 1, 0], sizes = [4, 8, 16], strides = [1, 1, 1]} : vector<4x10x16xf32> to vector<4x8x16xf32>
    %28 = vector.broadcast %4 : f32 to vector<4x8x16xf32>
    %29 = arith.mulf %27, %28 : vector<4x8x16xf32>
    %30 = arith.addf %26, %29 : vector<4x8x16xf32>
    %31 = vector.extract_strided_slice %11 {offsets = [0, 1, 0], sizes = [4, 8, 16], strides = [1, 1, 1]} : vector<4x10x16xf32> to vector<4x8x16xf32>
    %32 = vector.broadcast %5 : f32 to vector<4x8x16xf32>
    %33 = arith.mulf %31, %32 : vector<4x8x16xf32>
    %34 = arith.addf %30, %33 : vector<4x8x16xf32>
    %35 = vector.extract_strided_slice %9 {offsets = [0, 2, 0], sizes = [4, 8, 16], strides = [1, 1, 1]} : vector<4x10x16xf32> to vector<4x8x16xf32>
    %36 = vector.broadcast %6 : f32 to vector<4x8x16xf32>
    %37 = arith.mulf %35, %36 : vector<4x8x16xf32>
    %38 = arith.addf %34, %37 : vector<4x8x16xf32>
    %39 = vector.extract_strided_slice %10 {offsets = [0, 2, 0], sizes = [4, 8, 16], strides = [1, 1, 1]} : vector<4x10x16xf32> to vector<4x8x16xf32>
    %40 = vector.broadcast %7 : f32 to vector<4x8x16xf32>
    %41 = arith.mulf %39, %40 : vector<4x8x16xf32>
    %42 = arith.addf %38, %41 : vector<4x8x16xf32>
    %43 = vector.extract_strided_slice %11 {offsets = [0, 2, 0], sizes = [4, 8, 16], strides = [1, 1, 1]} : vector<4x10x16xf32> to vector<4x8x16xf32>
    %44 = vector.broadcast %8 : f32 to vector<4x8x16xf32>
    %45 = arith.mulf %43, %44 : vector<4x8x16xf32>
    %46 = arith.addf %42, %45 : vector<4x8x16xf32>
    %47 = vector.extract_strided_slice %46 {offsets = [0, 0, 0], sizes = [4, 8, 14], strides = [1, 1, 1]} : vector<4x8x16xf32> to vector<4x8x14xf32>
    %c0_18 = arith.constant 0 : index
    %c0_19 = arith.constant 0 : index
    %c0_20 = arith.constant 0 : index
    %48 = vector.load %arg3[%c0_18, %c0_19, %c0_20] : memref<4x14x14xf32, #tpu.memory_space<vmem>>, vector<4x8x14xf32>
    tpu.vector_store %arg3[%c0_18, %c0_19, %c0_20], %47 {strides = array<i32>} : memref<4x14x14xf32, #tpu.memory_space<vmem>>, vector<4x8x14xf32>,
    %c0_21 = arith.constant 0 : index
    %c8 = arith.constant 8 : index
    %c0_22 = arith.constant 0 : index
    %49 = vector.load %arg2[%c0_21, %c8, %c0_22] : memref<4x16x16xf32, #tpu.memory_space<vmem>>, vector<4x8x16xf32>
    %c15_i32_23 = arith.constant 15 : i32
    %50 = tpu.dynamic_rotate %49 by %c15_i32_23 dim 2 : vector<4x8x16xf32>, i32 -> vector<4x8x16xf32>
    %c14_i32_24 = arith.constant 14 : i32
    %51 = tpu.dynamic_rotate %49 by %c14_i32_24 dim 2 : vector<4x8x16xf32>, i32 -> vector<4x8x16xf32>
    %52 = vector.extract_strided_slice %49 {offsets = [0, 0, 0], sizes = [4, 6, 16], strides = [1, 1, 1]} : vector<4x8x16xf32> to vector<4x6x16xf32>
    %53 = vector.broadcast %0 : f32 to vector<4x6x16xf32>
    %54 = arith.mulf %52, %53 : vector<4x6x16xf32>
    %55 = vector.extract_strided_slice %50 {offsets = [0, 0, 0], sizes = [4, 6, 16], strides = [1, 1, 1]} : vector<4x8x16xf32> to vector<4x6x16xf32>
    %56 = vector.broadcast %1 : f32 to vector<4x6x16xf32>
    %57 = arith.mulf %55, %56 : vector<4x6x16xf32>
    %58 = arith.addf %54, %57 : vector<4x6x16xf32>
    %59 = vector.extract_strided_slice %51 {offsets = [0, 0, 0], sizes = [4, 6, 16], strides = [1, 1, 1]} : vector<4x8x16xf32> to vector<4x6x16xf32>
    %60 = vector.broadcast %2 : f32 to vector<4x6x16xf32>
    %61 = arith.mulf %59, %60 : vector<4x6x16xf32>
    %62 = arith.addf %58, %61 : vector<4x6x16xf32>
    %63 = vector.extract_strided_slice %49 {offsets = [0, 1, 0], sizes = [4, 6, 16], strides = [1, 1, 1]} : vector<4x8x16xf32> to vector<4x6x16xf32>
    %64 = vector.broadcast %3 : f32 to vector<4x6x16xf32>
    %65 = arith.mulf %63, %64 : vector<4x6x16xf32>
    %66 = arith.addf %62, %65 : vector<4x6x16xf32>
    %67 = vector.extract_strided_slice %50 {offsets = [0, 1, 0], sizes = [4, 6, 16], strides = [1, 1, 1]} : vector<4x8x16xf32> to vector<4x6x16xf32>
    %68 = vector.broadcast %4 : f32 to vector<4x6x16xf32>
    %69 = arith.mulf %67, %68 : vector<4x6x16xf32>
    %70 = arith.addf %66, %69 : vector<4x6x16xf32>
    %71 = vector.extract_strided_slice %51 {offsets = [0, 1, 0], sizes = [4, 6, 16], strides = [1, 1, 1]} : vector<4x8x16xf32> to vector<4x6x16xf32>
    %72 = vector.broadcast %5 : f32 to vector<4x6x16xf32>
    %73 = arith.mulf %71, %72 : vector<4x6x16xf32>
    %74 = arith.addf %70, %73 : vector<4x6x16xf32>
    %75 = vector.extract_strided_slice %49 {offsets = [0, 2, 0], sizes = [4, 6, 16], strides = [1, 1, 1]} : vector<4x8x16xf32> to vector<4x6x16xf32>
    %76 = vector.broadcast %6 : f32 to vector<4x6x16xf32>
    %77 = arith.mulf %75, %76 : vector<4x6x16xf32>
    %78 = arith.addf %74, %77 : vector<4x6x16xf32>
    %79 = vector.extract_strided_slice %50 {offsets = [0, 2, 0], sizes = [4, 6, 16], strides = [1, 1, 1]} : vector<4x8x16xf32> to vector<4x6x16xf32>
    %80 = vector.broadcast %7 : f32 to vector<4x6x16xf32>
    %81 = arith.mulf %79, %80 : vector<4x6x16xf32>
    %82 = arith.addf %78, %81 : vector<4x6x16xf32>
    %83 = vector.extract_strided_slice %51 {offsets = [0, 2, 0], sizes = [4, 6, 16], strides = [1, 1, 1]} : vector<4x8x16xf32> to vector<4x6x16xf32>
    %84 = vector.broadcast %8 : f32 to vector<4x6x16xf32>
    %85 = arith.mulf %83, %84 : vector<4x6x16xf32>
    %86 = arith.addf %82, %85 : vector<4x6x16xf32>
    %87 = vector.extract_strided_slice %86 {offsets = [0, 0, 0], sizes = [4, 6, 14], strides = [1, 1, 1]} : vector<4x6x16xf32> to vector<4x6x14xf32>
    %c0_25 = arith.constant 0 : index
    %c8_26 = arith.constant 8 : index
    %c0_27 = arith.constant 0 : index
    %88 = vector.load %arg3[%c0_25, %c8_26, %c0_27] : memref<4x14x14xf32, #tpu.memory_space<vmem>>, vector<4x6x14xf32>
    tpu.vector_store %arg3[%c0_25, %c8_26, %c0_27], %87 {strides = array<i32>} : memref<4x14x14xf32, #tpu.memory_space<vmem>>, vector<4x6x14xf32>,
    return
  }
  func.func @transform_0(%arg0: i32, %arg1: memref<3x3xf32, #tpu.memory_space<smem>>) -> (i32, i32, i32) {
    %c0_i32 = arith.constant 0 : i32
    %c0_i32_0 = arith.constant 0 : i32
    %c0_i32_1 = arith.constant 0 : i32
    return %arg0, %c0_i32, %c0_i32_0 : i32, i32, i32
  }
  func.func @transform_1(%arg0: i32, %arg1: memref<3x3xf32, #tpu.memory_space<smem>>) -> (i32, i32, i32) {
    %c0_i32 = arith.constant 0 : i32
    %c0_i32_0 = arith.constant 0 : i32
    %c0_i32_1 = arith.constant 0 : i32
    return %arg0, %c0_i32, %c0_i32_0 : i32, i32, i32
  }
}

</mosaic_0001>

<llo_original>
// kernel: tpu_custom_call.1
$region0: #{tpu_custom_call.1}
  #allocation0 [shape = 'u32[]', space=smem, size = 0x4, offset = 0x4, fixed_abs, tag = 'smem constant byte address 0x4 - core index']
  #allocation1 [shape = 'u32[144,128]{1,0:T(1,128)}', space=vmem, size = 0x12000, scoped, tag = 'internal scratch']
  #allocation2 [shape = 's32[1]{0}', space=sflag, size = 0x4, scoped, tag = 'scoped memory for tpu_custom_call.1']
  #allocation3 [shape = 'u8[2048]{0}', space=smem, size = 0x800, scoped, tag = 'prefetched SMEM operand 0']
  %s0 = inlined_call_operand.hbm [shape: f32[3,3], index: 0, kind: input, shape index: {}]
  %s1 = inlined_call_operand.hbm [shape: f32[8,16,16], index: 1, kind: input, shape index: {}]
  %s2 = inlined_call_operand.vmem [shape: f32[8,14,14], index: 2, kind: output, shape index: {}]
  %s3 = sld [smem:[#allocation0]]
  $region41: #{tpu_custom_call.1} parent=0
    _
  %s5 = ssub.s32 1, %s3
  %s6 = scalar_select 0, %s5, %s3
  %8 = dma.hbm_to_smem %s0, 64, [#allocation3], [#allocation2]
  %9 = dma.done [#allocation2], 64
  %10 = sfence
  $region1: #{tpu_custom_call.1} parent=0
    #allocation4 [shape = 'u8[65536]{0}', space=vmem, size = 0x10000, scoped, tag = 'input window, operand 1']
    #allocation5 [shape = 's32[2]{0}', space=sflag, size = 0x8, scoped, tag = 'scoped memory for tpu_custom_call.1']
    %11 = vsyncpa [#allocation5], 0
    %s12 = scalar_lea.sflag [#allocation5], 1
    %13 = vsyncpa %s12, 0
    loop: start=0, step=1, limit=4
    $region2: #{tpu_custom_call.1} parent=1 // loop_pre_header
      _
    $region3: #{tpu_custom_call.1} parent=1 // loop_header
      %s15 = sphi 0, %s19
      %p16 = scmp.ge.s32.totalorder %s15, 4
      %s25 = sphi 0, %s27
      %s28 = sphi 0, %s25
      %s29 = sphi 0, %s28
      %s45 = sphi 0, %s29
      %s51 = sphi 0, %s53
      %s54 = sphi 0, %s51
      %s55 = sphi 0, %s54
      %s71 = sphi 0, %s55
    $region4: #{tpu_custom_call.1} parent=1 // loop_header_branch
      %18 = sbr.rel (%p16) target = $region8
    $region5: #{tpu_custom_call.1} parent=1 // loop_body
      %s20 = ssub.s32 %s15, 1
      %s21 = ssub.s32 %s15, 2
      %s22 = sadd.s32 %s15, 1
      %s23 = ssub.s32 %s15, %s22
      %p24 = scmp.eq.s32.totalorder %s23, 0
      %s26 = sadd.s32 %s25, 1
      %s27 = scalar_select %p24, %s25, %s26
      %p30 = pneg %p24
      %p31 = scmp.eq.s32.totalorder %s15, 1
      %p32 = por %p30, %p31
      %p33 = scmp.ne.s32.totalorder %s25, %s28
      %p34 = scmp.eq.s32.totalorder %s15, 0
      %p35 = por %p33, %p34
      %p36 = scmp.ne.s32.totalorder %s25, %s28
      %p37 = scmp.eq.s32.totalorder %s20, 1
      %p38 = por %p36, %p37
      %p39 = scmp.ne.s32.totalorder %s28, %s29
      %p40 = scmp.eq.s32.totalorder %s20, 0
      %p41 = por %p39, %p40
      %p42 = scmp.ne.s32.totalorder %s28, %s29
      %p43 = scmp.eq.s32.totalorder %s21, 1
      %p44 = por %p42, %p43
      %p46 = scmp.ne.s32.totalorder %s29, %s45
      %p47 = scmp.eq.s32.totalorder %s21, 0
      %p48 = por %p46, %p47
      %s49 = ssub.s32 %s15, %s22
      %p50 = scmp.eq.s32.totalorder %s49, 0
      %s52 = sadd.s32 %s51, 1
      %s53 = scalar_select %p50, %s51, %s52
      %p56 = pneg %p50
      %p57 = scmp.eq.s32.totalorder %s15, 1
      %p58 = por %p56, %p57
      %p59 = scmp.ne.s32.totalorder %s51, %s54
      %p60 = scmp.eq.s32.totalorder %s15, 0
      %p61 = por %p59, %p60
      %p62 = scmp.ne.s32.totalorder %s51, %s54
      %p63 = scmp.eq.s32.totalorder %s20, 1
      %p64 = por %p62, %p63
      %p65 = scmp.ne.s32.totalorder %s54, %s55
      %p66 = scmp.eq.s32.totalorder %s20, 0
      %p67 = por %p65, %p66
      %p68 = scmp.ne.s32.totalorder %s54, %s55
      %p69 = scmp.eq.s32.totalorder %s21, 1
      %p70 = por %p68, %p69
      %p72 = scmp.ne.s32.totalorder %s55, %s71
      %p73 = scmp.eq.s32.totalorder %s21, 0
      %p74 = por %p72, %p73
      %p75 = scmp.le.s32.totalorder 1, %s15
      %p76 = scmp.lt.s32.totalorder %s15, 3
      %p77 = pnand %p75, %p76
      %p78 = pneg %p77
      // Predicated region
      $region9: #{tpu_custom_call.1} parent=5 // pred_check
        _
      $region10: #{tpu_custom_call.1} parent=5 // pred_check_branch
        %80 = sbr.rel (%p77) target = $region12
      $region11: #{tpu_custom_call.1} parent=5 // pred_region
        %s81 = ssub.s32 %s15, 1
      $region12: #{tpu_custom_call.1} parent=5 // pred_fallthru
        _
      %p82 = scmp.lt.s32.totalorder %s15, 2
      // Predicated region
      $region13: #{tpu_custom_call.1} parent=5 // pred_check
        %p83 = pneg %p82
      $region14: #{tpu_custom_call.1} parent=5 // pred_check_branch
        %85 = sbr.rel (%p83) target = $region16
      $region15: #{tpu_custom_call.1} parent=5 // pred_region
        // Predicated region
        $region17: #{tpu_custom_call.1} parent=15 // pred_check
          %p86 = pneg %p35
        $region18: #{tpu_custom_call.1} parent=15 // pred_check_branch
          %88 = sbr.rel (%p86) target = $region20
        $region19: #{tpu_custom_call.1} parent=15 // pred_region
          %s89 = sand.u32 %s25, 1
          %s90 = scalar_lea.sflag [#allocation5], %s89
          %s91 = sand.u32 %s25, 1
          %s92 = smul.addr %s91, 64
          %s93 = scalar_lea.vmem [#allocation4], %s92
          %s94 = smul.u32 4, %s15
          %s96 = ssub.s32 1024, 1024
          %97 = vsyncadd %s90, %s96
          %s98 = smul.addr %s94, 2
          %s99 = smul.addr %s98, 128
          %s100 = scalar_lea.hbm %s1, %s99
          %s101 = sshll.u32 %s93, 4
          %s102 = int_to_ptr.vmem [resolvable:$true] %s101
          %107 = dma.hbm_to_vmem [thread:$0]  %s100, 1024, %s102, %s90, 128, 128, 8
        $region20: #{tpu_custom_call.1} parent=15 // pred_fallthru
          _
      $region16: #{tpu_custom_call.1} parent=5 // pred_fallthru
        _
      %p108 = scmp.le.s32.totalorder 1, %s15
      %p109 = scmp.lt.s32.totalorder %s15, 3
      %p110 = pnand %p108, %p109
      %p111 = pneg %p110
      // Predicated region
      $region21: #{tpu_custom_call.1} parent=5 // pred_check
        _
      $region22: #{tpu_custom_call.1} parent=5 // pred_check_branch
        %113 = sbr.rel (%p110) target = $region24
      $region23: #{tpu_custom_call.1} parent=5 // pred_region
        %s114 = ssub.s32 %s15, 1
        %s115 = sand.u32 %s28, 1
        %s116 = scalar_lea.sflag [#allocation5], %s115
        %s117 = sand.u32 %s28, 1
        %s118 = smul.addr %s117, 64
        %s119 = scalar_lea.vmem [#allocation4], %s118
        // Predicated region
        $region25: #{tpu_custom_call.1} parent=23 // pred_check
          %p120 = pneg %p41
        $region26: #{tpu_custom_call.1} parent=23 // pred_check_branch
          %122 = sbr.rel (%p120) target = $region28
        $region27: #{tpu_custom_call.1} parent=23 // pred_region
          %123 = dma.done %s116, 1024
        $region28: #{tpu_custom_call.1} parent=23 // pred_fallthru
          _
        %s124 = sand.u32 %s28, 1
        %s125 = scalar_lea.sflag [#allocation5], %s124
        %s126 = sand.u32 %s28, 1
        %s127 = smul.addr %s126, 64
        %s128 = scalar_lea.vmem [#allocation4], %s127
        %p129 = pneg %p41
        %p130 = pneg %p38
        %p131 = pneg %p67
        %p132 = pneg %p64
        %s133 = smul.u32 4, %s20
        %p134 = scmp.lt.s32.totalorder %s133, 7
        %s135 = scalar_select %p134, %s133, 7
        %s136 = smul.addr %s135, 2
        %s137 = smul.addr %s136, 8
        %s138 = scalar_lea.vmem %s2, %s137
        %s139 = smul.u32 4, %s20
        %s140 = smul.u32 4, %s20
        %p141 = scmp.lt.s32.totalorder %s140, 7
        %s142 = scalar_select %p141, %s140, 7
        %s143 = smul.addr %s142, 2
        %s144 = smul.addr %s143, 8
        %s145 = scalar_lea.vmem %s2, %s144
        %s146 = smul.u32 4, %s20
        %s147 = sld [smem:[#allocation3]]
        %s148 = sld [smem:[#allocation3 + $0x1]]
        %s149 = sld [smem:[#allocation3 + $0x2]]
        %s150 = sld [smem:[#allocation3 + $0x80]]
        %s151 = sld [smem:[#allocation3 + $0x81]]
        %s152 = sld [smem:[#allocation3 + $0x82]]
        %s153 = sld [smem:[#allocation3 + $0x100]]
        %s154 = sld [smem:[#allocation3 + $0x101]]
        %s155 = sld [smem:[#allocation3 + $0x102]]
        %v156 = vld [vmem:[%s119] sm:$0xff]
        %v157 = vld [vmem:[%s119 + $0x8] sm:$0x3]
        %v158 = vld [vmem:[%s119 + $0x10] sm:$0xff]
        %v159 = vld [vmem:[%s119 + $0x18] sm:$0x3]
        %v160 = vld [vmem:[%s119 + $0x20] sm:$0xff]
        %v161 = vld [vmem:[%s119 + $0x28] sm:$0x3]
        %v162 = vld [vmem:[%s119 + $0x30] sm:$0xff]
        %v163 = vld [vmem:[%s119 + $0x38] sm:$0x3]
        %vm164 = vcmask 1047680
        %165 = vrot.lane.b32.xlu0 %v156, 16
        %v166 = vpop.permute.xlu0 %165
        %v167 = vsel %vm164, %v166, %v156
        %168 = vrot.lane.b32.xlu0 %v157, 16
        %v169 = vpop.permute.xlu0 %168
        %v170 = vsel %vm164, %v169, %v157
        %171 = vrot.lane.b32.xlu0 %v158, 16
        %v172 = vpop.permute.xlu0 %171
        %v173 = vsel %vm164, %v172, %v158
        %174 = vrot.lane.b32.xlu0 %v159, 16
        %v175 = vpop.permute.xlu0 %174
        %v176 = vsel %vm164, %v175, %v159
        %177 = vrot.lane.b32.xlu0 %v160, 16
        %v178 = vpop.permute.xlu0 %177
        %v179 = vsel %vm164, %v178, %v160
        %180 = vrot.lane.b32.xlu0 %v161, 16
        %v181 = vpop.permute.xlu0 %180
        %v182 = vsel %vm164, %v181, %v161
        %183 = vrot.lane.b32.xlu0 %v162, 16
        %v184 = vpop.permute.xlu0 %183
        %v185 = vsel %vm164, %v184, %v162
        %186 = vrot.lane.b32.xlu0 %v163, 16
        %v187 = vpop.permute.xlu0 %186
        %v188 = vsel %vm164, %v187, %v163
        %189 = vrot.lane.b32.xlu0 %v167, 16
        %v190 = vpop.permute.xlu0 %189
        %191 = vrot.lane.b32.xlu0 %v170, 16
        %v192 = vpop.permute.xlu0 %191
        %193 = vrot.lane.b32.xlu0 %v173, 16
        %v194 = vpop.permute.xlu0 %193
        %195 = vrot.lane.b32.xlu0 %v176, 16
        %v196 = vpop.permute.xlu0 %195
        %197 = vrot.lane.b32.xlu0 %v179, 16
        %v198 = vpop.permute.xlu0 %197
        %199 = vrot.lane.b32.xlu0 %v182, 16
        %v200 = vpop.permute.xlu0 %199
        %201 = vrot.lane.b32.xlu0 %v185, 16
        %v202 = vpop.permute.xlu0 %201
        %203 = vrot.lane.b32.xlu0 %v188, 16
        %v204 = vpop.permute.xlu0 %203
        %v205 = vsel %vm164, %v190, %v156
        %v206 = vsel %vm164, %v192, %v157
        %v207 = vsel %vm164, %v194, %v158
        %v208 = vsel %vm164, %v196, %v159
        %v209 = vsel %vm164, %v198, %v160
        %v210 = vsel %vm164, %v200, %v161
        %v211 = vsel %vm164, %v202, %v162
        %v212 = vsel %vm164, %v204, %v163
        %v213 = vstv %s147
        %v214 = vmul.f32 %v156, %v213
        %v215 = vmul.f32 %v158, %v213
        %v216 = vmul.f32 %v160, %v213
        %v217 = vmul.f32 %v162, %v213
        %v218 = vstv %s148
        %v219 = vmul.f32 %v205, %v218
        %v220 = vmul.f32 %v207, %v218
        %v221 = vmul.f32 %v209, %v218
        %v222 = vmul.f32 %v211, %v218
        %227 = vrot.lane.b32.xlu0 %v219, 127
        %v228 = vpop.permute.xlu0 %227
        %229 = vrot.lane.b32.xlu0 %v220, 127
        %v230 = vpop.permute.xlu0 %229
        %231 = vrot.lane.b32.xlu0 %v221, 127
        %v232 = vpop.permute.xlu0 %231
        %233 = vrot.lane.b32.xlu0 %v222, 127
        %v234 = vpop.permute.xlu0 %233
        %v239 = vadd.f32 %v214, %v228
        %v240 = vadd.f32 %v215, %v230
        %v241 = vadd.f32 %v216, %v232
        %v242 = vadd.f32 %v217, %v234
        %v243 = vstv %s149
        %v244 = vmul.f32 %v205, %v243
        %v245 = vmul.f32 %v207, %v243
        %v246 = vmul.f32 %v209, %v243
        %v247 = vmul.f32 %v211, %v243
        %252 = vrot.lane.b32.xlu0 %v244, 126
        %v253 = vpop.permute.xlu0 %252
        %254 = vrot.lane.b32.xlu0 %v245, 126
        %v255 = vpop.permute.xlu0 %254
        %256 = vrot.lane.b32.xlu0 %v246, 126
        %v257 = vpop.permute.xlu0 %256
        %258 = vrot.lane.b32.xlu0 %v247, 126
        %v259 = vpop.permute.xlu0 %258
        %v264 = vadd.f32 %v239, %v253
        %v265 = vadd.f32 %v240, %v255
        %v266 = vadd.f32 %v241, %v257
        %v267 = vadd.f32 %v242, %v259
        %v268 = vstv %s150
        %v269 = vmul.f32 %v156, %v268
        %v270 = vmul.f32 %v157, %v268
        %v271 = vmul.f32 %v158, %v268
        %v272 = vmul.f32 %v159, %v268
        %v273 = vmul.f32 %v160, %v268
        %v274 = vmul.f32 %v161, %v268
        %v275 = vmul.f32 %v162, %v268
        %v276 = vmul.f32 %v163, %v268
        %vm285 = vcmask 1046528
        %v286 = vrot.slane %v269, 1
        %v287 = vrot.slane %v270, 1
        %v288 = vsel %vm285, %v286, %v287
        %v289 = vrot.slane %v271, 1
        %v290 = vrot.slane %v272, 1
        %v291 = vsel %vm285, %v289, %v290
        %v292 = vrot.slane %v273, 1
        %v293 = vrot.slane %v274, 1
        %v294 = vsel %vm285, %v292, %v293
        %v295 = vrot.slane %v275, 1
        %v296 = vrot.slane %v276, 1
        %v297 = vsel %vm285, %v295, %v296
        %v302 = vadd.f32 %v264, %v288
        %v303 = vadd.f32 %v265, %v291
        %v304 = vadd.f32 %v266, %v294
        %v305 = vadd.f32 %v267, %v297
        %v306 = vstv %s151
        %v307 = vmul.f32 %v205, %v306
        %v308 = vmul.f32 %v206, %v306
        %v309 = vmul.f32 %v207, %v306
        %v310 = vmul.f32 %v208, %v306
        %v311 = vmul.f32 %v209, %v306
        %v312 = vmul.f32 %v210, %v306
        %v313 = vmul.f32 %v211, %v306
        %v314 = vmul.f32 %v212, %v306
        %v323 = vrot.slane %v307, 1
        %v324 = vrot.slane %v308, 1
        %v325 = vsel %vm285, %v323, %v324
        %v326 = vrot.slane %v309, 1
        %v327 = vrot.slane %v310, 1
        %v328 = vsel %vm285, %v326, %v327
        %v329 = vrot.slane %v311, 1
        %v330 = vrot.slane %v312, 1
        %v331 = vsel %vm285, %v329, %v330
        %v332 = vrot.slane %v313, 1
        %v333 = vrot.slane %v314, 1
        %v334 = vsel %vm285, %v332, %v333
        %335 = vrot.lane.b32.xlu0 %v325, 127
        %v336 = vpop.permute.xlu0 %335
        %337 = vrot.lane.b32.xlu0 %v328, 127
        %v338 = vpop.permute.xlu0 %337
        %339 = vrot.lane.b32.xlu0 %v331, 127
        %v340 = vpop.permute.xlu0 %339
        %341 = vrot.lane.b32.xlu0 %v334, 127
        %v342 = vpop.permute.xlu0 %341
        %v347 = vadd.f32 %v302, %v336
        %v348 = vadd.f32 %v303, %v338
        %v349 = vadd.f32 %v304, %v340
        %v350 = vadd.f32 %v305, %v342
        %v351 = vstv %s152
        %v352 = vmul.f32 %v205, %v351
        %v353 = vmul.f32 %v206, %v351
        %v354 = vmul.f32 %v207, %v351
        %v355 = vmul.f32 %v208, %v351
        %v356 = vmul.f32 %v209, %v351
        %v357 = vmul.f32 %v210, %v351
        %v358 = vmul.f32 %v211, %v351
        %v359 = vmul.f32 %v212, %v351
        %v368 = vrot.slane %v352, 1
        %v369 = vrot.slane %v353, 1
        %v370 = vsel %vm285, %v368, %v369
        %v371 = vrot.slane %v354, 1
        %v372 = vrot.slane %v355, 1
        %v373 = vsel %vm285, %v371, %v372
        %v374 = vrot.slane %v356, 1
        %v375 = vrot.slane %v357, 1
        %v376 = vsel %vm285, %v374, %v375
        %v377 = vrot.slane %v358, 1
        %v378 = vrot.slane %v359, 1
        %v379 = vsel %vm285, %v377, %v378
        %380 = vrot.lane.b32.xlu0 %v370, 126
        %v381 = vpop.permute.xlu0 %380
        %382 = vrot.lane.b32.xlu0 %v373, 126
        %v383 = vpop.permute.xlu0 %382
        %384 = vrot.lane.b32.xlu0 %v376, 126
        %v385 = vpop.permute.xlu0 %384
        %386 = vrot.lane.b32.xlu0 %v379, 126
        %v387 = vpop.permute.xlu0 %386
        %v392 = vadd.f32 %v347, %v381
        %v393 = vadd.f32 %v348, %v383
        %v394 = vadd.f32 %v349, %v385
        %v395 = vadd.f32 %v350, %v387
        %v396 = vstv %s153
        %v397 = vmul.f32 %v156, %v396
        %v398 = vmul.f32 %v157, %v396
        %v399 = vmul.f32 %v158, %v396
        %v400 = vmul.f32 %v159, %v396
        %v401 = vmul.f32 %v160, %v396
        %v402 = vmul.f32 %v161, %v396
        %v403 = vmul.f32 %v162, %v396
        %v404 = vmul.f32 %v163, %v396
        %vm413 = vcmask 1045504
        %v414 = vrot.slane %v397, 2
        %v415 = vrot.slane %v398, 2
        %v416 = vsel %vm413, %v414, %v415
        %v417 = vrot.slane %v399, 2
        %v418 = vrot.slane %v400, 2
        %v419 = vsel %vm413, %v417, %v418
        %v420 = vrot.slane %v401, 2
        %v421 = vrot.slane %v402, 2
        %v422 = vsel %vm413, %v420, %v421
        %v423 = vrot.slane %v403, 2
        %v424 = vrot.slane %v404, 2
        %v425 = vsel %vm413, %v423, %v424
        %v430 = vadd.f32 %v392, %v416
        %v431 = vadd.f32 %v393, %v419
        %v432 = vadd.f32 %v394, %v422
        %v433 = vadd.f32 %v395, %v425
        %v434 = vstv %s154
        %v435 = vmul.f32 %v205, %v434
        %v436 = vmul.f32 %v206, %v434
        %v437 = vmul.f32 %v207, %v434
        %v438 = vmul.f32 %v208, %v434
        %v439 = vmul.f32 %v209, %v434
        %v440 = vmul.f32 %v210, %v434
        %v441 = vmul.f32 %v211, %v434
        %v442 = vmul.f32 %v212, %v434
        %v451 = vrot.slane %v435, 2
        %v452 = vrot.slane %v436, 2
        %v453 = vsel %vm413, %v451, %v452
        %v454 = vrot.slane %v437, 2
        %v455 = vrot.slane %v438, 2
        %v456 = vsel %vm413, %v454, %v455
        %v457 = vrot.slane %v439, 2
        %v458 = vrot.slane %v440, 2
        %v459 = vsel %vm413, %v457, %v458
        %v460 = vrot.slane %v441, 2
        %v461 = vrot.slane %v442, 2
        %v462 = vsel %vm413, %v460, %v461
        %463 = vrot.lane.b32.xlu0 %v453, 127
        %v464 = vpop.permute.xlu0 %463
        %465 = vrot.lane.b32.xlu0 %v456, 127
        %v466 = vpop.permute.xlu0 %465
        %467 = vrot.lane.b32.xlu0 %v459, 127
        %v468 = vpop.permute.xlu0 %467
        %469 = vrot.lane.b32.xlu0 %v462, 127
        %v470 = vpop.permute.xlu0 %469
        %v475 = vadd.f32 %v430, %v464
        %v476 = vadd.f32 %v431, %v466
        %v477 = vadd.f32 %v432, %v468
        %v478 = vadd.f32 %v433, %v470
        %v479 = vstv %s155
        %v480 = vmul.f32 %v205, %v479
        %v481 = vmul.f32 %v206, %v479
        %v482 = vmul.f32 %v207, %v479
        %v483 = vmul.f32 %v208, %v479
        %v484 = vmul.f32 %v209, %v479
        %v485 = vmul.f32 %v210, %v479
        %v486 = vmul.f32 %v211, %v479
        %v487 = vmul.f32 %v212, %v479
        %v496 = vrot.slane %v480, 2
        %v497 = vrot.slane %v481, 2
        %v498 = vsel %vm413, %v496, %v497
        %v499 = vrot.slane %v482, 2
        %v500 = vrot.slane %v483, 2
        %v501 = vsel %vm413, %v499, %v500
        %v502 = vrot.slane %v484, 2
        %v503 = vrot.slane %v485, 2
        %v504 = vsel %vm413, %v502, %v503
        %v505 = vrot.slane %v486, 2
        %v506 = vrot.slane %v487, 2
        %v507 = vsel %vm413, %v505, %v506
        %508 = vrot.lane.b32.xlu0 %v498, 126
        %v509 = vpop.permute.xlu0 %508
        %510 = vrot.lane.b32.xlu0 %v501, 126
        %v511 = vpop.permute.xlu0 %510
        %512 = vrot.lane.b32.xlu0 %v504, 126
        %v513 = vpop.permute.xlu0 %512
        %514 = vrot.lane.b32.xlu0 %v507, 126
        %v515 = vpop.permute.xlu0 %514
        %v520 = vadd.f32 %v475, %v509
        %v521 = vadd.f32 %v476, %v511
        %v522 = vadd.f32 %v477, %v513
        %v523 = vadd.f32 %v478, %v515
        %vm524 = vcmask 113664
        %525 = vst.msk [vmem:[%s145] sm:$0xff] %vm524, %v520
        %526 = vst.msk [vmem:[%s145 + $0x10] sm:$0xff] %vm524, %v521
        %527 = vst.msk [vmem:[%s145 + $0x20] sm:$0xff] %vm524, %v522
        %528 = vst.msk [vmem:[%s145 + $0x30] sm:$0xff] %vm524, %v523
        %v529 = vld [vmem:[%s119 + $0x8] sm:$0xff]
        %v530 = vld [vmem:[%s119 + $0x18] sm:$0xff]
        %v531 = vld [vmem:[%s119 + $0x28] sm:$0xff]
        %v532 = vld [vmem:[%s119 + $0x38] sm:$0xff]
        %533 = vrot.lane.b32.xlu0 %v529, 16
        %v534 = vpop.permute.xlu0 %533
        %v535 = vsel %vm164, %v534, %v529
        %536 = vrot.lane.b32.xlu0 %v530, 16
        %v537 = vpop.permute.xlu0 %536
        %v538 = vsel %vm164, %v537, %v530
        %539 = vrot.lane.b32.xlu0 %v531, 16
        %v540 = vpop.permute.xlu0 %539
        %v541 = vsel %vm164, %v540, %v531
        %542 = vrot.lane.b32.xlu0 %v532, 16
        %v543 = vpop.permute.xlu0 %542
        %v544 = vsel %vm164, %v543, %v532
        %545 = vrot.lane.b32.xlu0 %v535, 16
        %v546 = vpop.permute.xlu0 %545
        %547 = vrot.lane.b32.xlu0 %v538, 16
        %v548 = vpop.permute.xlu0 %547
        %549 = vrot.lane.b32.xlu0 %v541, 16
        %v550 = vpop.permute.xlu0 %549
        %551 = vrot.lane.b32.xlu0 %v544, 16
        %v552 = vpop.permute.xlu0 %551
        %v553 = vsel %vm164, %v546, %v529
        %v554 = vsel %vm164, %v548, %v530
        %v555 = vsel %vm164, %v550, %v531
        %v556 = vsel %vm164, %v552, %v532
        %v557 = vmul.f32 %v529, %v213
        %v558 = vmul.f32 %v530, %v213
        %v559 = vmul.f32 %v531, %v213
        %v560 = vmul.f32 %v532, %v213
        %v561 = vmul.f32 %v553, %v218
        %v562 = vmul.f32 %v554, %v218
        %v563 = vmul.f32 %v555, %v218
        %v564 = vmul.f32 %v556, %v218
        %569 = vrot.lane.b32.xlu0 %v561, 127
        %v570 = vpop.permute.xlu0 %569
        %571 = vrot.lane.b32.xlu0 %v562, 127
        %v572 = vpop.permute.xlu0 %571
        %573 = vrot.lane.b32.xlu0 %v563, 127
        %v574 = vpop.permute.xlu0 %573
        %575 = vrot.lane.b32.xlu0 %v564, 127
        %v576 = vpop.permute.xlu0 %575
        %v581 = vadd.f32 %v557, %v570
        %v582 = vadd.f32 %v558, %v572
        %v583 = vadd.f32 %v559, %v574
        %v584 = vadd.f32 %v560, %v576
        %v585 = vmul.f32 %v553, %v243
        %v586 = vmul.f32 %v554, %v243
        %v587 = vmul.f32 %v555, %v243
        %v588 = vmul.f32 %v556, %v243
        %593 = vrot.lane.b32.xlu0 %v585, 126
        %v594 = vpop.permute.xlu0 %593
        %595 = vrot.lane.b32.xlu0 %v586, 126
        %v596 = vpop.permute.xlu0 %595
        %597 = vrot.lane.b32.xlu0 %v587, 126
        %v598 = vpop.permute.xlu0 %597
        %599 = vrot.lane.b32.xlu0 %v588, 126
        %v600 = vpop.permute.xlu0 %599
        %v605 = vadd.f32 %v581, %v594
        %v606 = vadd.f32 %v582, %v596
        %v607 = vadd.f32 %v583, %v598
        %v608 = vadd.f32 %v584, %v600
        %v609 = vmul.f32 %v529, %v268
        %v610 = vmul.f32 %v530, %v268
        %v611 = vmul.f32 %v531, %v268
        %v612 = vmul.f32 %v532, %v268
        %v617 = vrot.slane %v609, 1
        %v618 = vrot.slane %v610, 1
        %v619 = vrot.slane %v611, 1
        %v620 = vrot.slane %v612, 1
        %v625 = vadd.f32 %v605, %v617
        %v626 = vadd.f32 %v606, %v618
        %v627 = vadd.f32 %v607, %v619
        %v628 = vadd.f32 %v608, %v620
        %v629 = vmul.f32 %v553, %v306
        %v630 = vmul.f32 %v554, %v306
        %v631 = vmul.f32 %v555, %v306
        %v632 = vmul.f32 %v556, %v306
        %v637 = vrot.slane %v629, 1
        %v638 = vrot.slane %v630, 1
        %v639 = vrot.slane %v631, 1
        %v640 = vrot.slane %v632, 1
        %641 = vrot.lane.b32.xlu0 %v637, 127
        %v642 = vpop.permute.xlu0 %641
        %643 = vrot.lane.b32.xlu0 %v638, 127
        %v644 = vpop.permute.xlu0 %643
        %645 = vrot.lane.b32.xlu0 %v639, 127
        %v646 = vpop.permute.xlu0 %645
        %647 = vrot.lane.b32.xlu0 %v640, 127
        %v648 = vpop.permute.xlu0 %647
        %v653 = vadd.f32 %v625, %v642
        %v654 = vadd.f32 %v626, %v644
        %v655 = vadd.f32 %v627, %v646
        %v656 = vadd.f32 %v628, %v648
        %v657 = vmul.f32 %v553, %v351
        %v658 = vmul.f32 %v554, %v351
        %v659 = vmul.f32 %v555, %v351
        %v660 = vmul.f32 %v556, %v351
        %v665 = vrot.slane %v657, 1
        %v666 = vrot.slane %v658, 1
        %v667 = vrot.slane %v659, 1
        %v668 = vrot.slane %v660, 1
        %669 = vrot.lane.b32.xlu0 %v665, 126
        %v670 = vpop.permute.xlu0 %669
        %671 = vrot.lane.b32.xlu0 %v666, 126
        %v672 = vpop.permute.xlu0 %671
        %673 = vrot.lane.b32.xlu0 %v667, 126
        %v674 = vpop.permute.xlu0 %673
        %675 = vrot.lane.b32.xlu0 %v668, 126
        %v676 = vpop.permute.xlu0 %675
        %v681 = vadd.f32 %v653, %v670
        %v682 = vadd.f32 %v654, %v672
        %v683 = vadd.f32 %v655, %v674
        %v684 = vadd.f32 %v656, %v676
        %v685 = vmul.f32 %v529, %v396
        %v686 = vmul.f32 %v530, %v396
        %v687 = vmul.f32 %v531, %v396
        %v688 = vmul.f32 %v532, %v396
        %v693 = vrot.slane %v685, 2
        %v694 = vrot.slane %v686, 2
        %v695 = vrot.slane %v687, 2
        %v696 = vrot.slane %v688, 2
        %v701 = vadd.f32 %v681, %v693
        %v702 = vadd.f32 %v682, %v694
        %v703 = vadd.f32 %v683, %v695
        %v704 = vadd.f32 %v684, %v696
        %v705 = vmul.f32 %v553, %v434
        %v706 = vmul.f32 %v554, %v434
        %v707 = vmul.f32 %v555, %v434
        %v708 = vmul.f32 %v556, %v434
        %v713 = vrot.slane %v705, 2
        %v714 = vrot.slane %v706, 2
        %v715 = vrot.slane %v707, 2
        %v716 = vrot.slane %v708, 2
        %717 = vrot.lane.b32.xlu0 %v713, 127
        %v718 = vpop.permute.xlu0 %717
        %719 = vrot.lane.b32.xlu0 %v714, 127
        %v720 = vpop.permute.xlu0 %719
        %721 = vrot.lane.b32.xlu0 %v715, 127
        %v722 = vpop.permute.xlu0 %721
        %723 = vrot.lane.b32.xlu0 %v716, 127
        %v724 = vpop.permute.xlu0 %723
        %v729 = vadd.f32 %v701, %v718
        %v730 = vadd.f32 %v702, %v720
        %v731 = vadd.f32 %v703, %v722
        %v732 = vadd.f32 %v704, %v724
        %v733 = vmul.f32 %v553, %v479
        %v734 = vmul.f32 %v554, %v479
        %v735 = vmul.f32 %v555, %v479
        %v736 = vmul.f32 %v556, %v479
        %v741 = vrot.slane %v733, 2
        %v742 = vrot.slane %v734, 2
        %v743 = vrot.slane %v735, 2
        %v744 = vrot.slane %v736, 2
        %745 = vrot.lane.b32.xlu0 %v741, 126
        %v746 = vpop.permute.xlu0 %745
        %747 = vrot.lane.b32.xlu0 %v742, 126
        %v748 = vpop.permute.xlu0 %747
        %749 = vrot.lane.b32.xlu0 %v743, 126
        %v750 = vpop.permute.xlu0 %749
        %751 = vrot.lane.b32.xlu0 %v744, 126
        %v752 = vpop.permute.xlu0 %751
        %v757 = vadd.f32 %v729, %v746
        %v758 = vadd.f32 %v730, %v748
        %v759 = vadd.f32 %v731, %v750
        %v760 = vadd.f32 %v732, %v752
        %vm761 = vcmask 111616
        %762 = vst.msk [vmem:[%s145 + $0x8] sm:$0x3f] %vm761, %v757
        %763 = vst.msk [vmem:[%s145 + $0x18] sm:$0x3f] %vm761, %v758
        %764 = vst.msk [vmem:[%s145 + $0x28] sm:$0x3f] %vm761, %v759
        %765 = vst.msk [vmem:[%s145 + $0x38] sm:$0x3f] %vm761, %v760
        %s766 = smul.u32 4, %s20
        %p767 = scmp.lt.s32.totalorder %s766, 7
        %s768 = scalar_select %p767, %s766, 7
        %s769 = smul.addr %s768, 2
        %s770 = smul.addr %s769, 8
        %s771 = scalar_lea.vmem %s2, %s770
        // Predicated region
        $region29: #{tpu_custom_call.1} parent=23 // pred_check
          %p772 = pneg %p64
        $region30: #{tpu_custom_call.1} parent=23 // pred_check_branch
          %774 = sbr.rel (%p772) target = $region32
        $region31: #{tpu_custom_call.1} parent=23 // pred_region
          %s775 = smul.u32 4, %s20
        $region32: #{tpu_custom_call.1} parent=23 // pred_fallthru
          _
      $region24: #{tpu_custom_call.1} parent=5 // pred_fallthru
        _
      %p776 = scmp.le.s32.totalorder 2, %s15
      // Predicated region
      $region33: #{tpu_custom_call.1} parent=5 // pred_check
        %p777 = pneg %p776
      $region34: #{tpu_custom_call.1} parent=5 // pred_check_branch
        %779 = sbr.rel (%p777) target = $region36
      $region35: #{tpu_custom_call.1} parent=5 // pred_region
        %s780 = ssub.s32 %s15, 2
        // Predicated region
        $region37: #{tpu_custom_call.1} parent=35 // pred_check
          %p781 = pneg %p70
        $region38: #{tpu_custom_call.1} parent=35 // pred_check_branch
          %783 = sbr.rel (%p781) target = $region40
        $region39: #{tpu_custom_call.1} parent=35 // pred_region
          %s784 = smul.u32 4, %s21
          %p785 = scmp.lt.s32.totalorder %s784, 7
          %s786 = scalar_select %p785, %s784, 7
          %s787 = smul.addr %s786, 2
          %s788 = smul.addr %s787, 8
          %s789 = scalar_lea.vmem %s2, %s788
        $region40: #{tpu_custom_call.1} parent=35 // pred_fallthru
          _
      $region36: #{tpu_custom_call.1} parent=5 // pred_fallthru
        _
    $region6: #{tpu_custom_call.1} parent=1 // loop_footer
      %s19 = sadd.s32 1, %s15
    $region7: #{tpu_custom_call.1} parent=1 // loop_footer_branch
      %14 = sbr.rel target = $region3
    $region8: #{tpu_custom_call.1} parent=1 // loop_exit
      _
    %790 = vsyncpa [#allocation5], 1
    %s791 = scalar_lea.sflag [#allocation5], 1
    %792 = vsyncpa %s791, 1

</llo_original>
